<compile_context>
chip_gen: v7x
topology: tpu7x:2x2x1
jax: 0.10.0
libtpu: 0.0.40
codegen_flags: <defaults>
</compile_context>

<pallas_src>
import functools

import jax
import jax.numpy as jnp
from jax.experimental import pallas as pl
from jax.experimental.pallas import tpu as pltpu


def _round_up(v, m):
    return ((v + m - 1) // m) * m


def _dwsample_kernel(xm_ref, xh_ref, w_ref, b_ref, o_ref):
    # xm_ref: (1, th, 2, Wc, C2)  bf16  main tile: row-pairs [i*th, i*th+th)
    # xh_ref: (1, 1,  2, Wc, C2)  bf16  halo: row-pair i*th + th
    # w_ref : (3, 2, C2, Coutp)   bf16  [kh, term]: term0 -> kw=0,1 ; term1 -> kw=2
    # b_ref : (1, Coutp)          f32
    # o_ref : (1, th, Wo, Coutp)
    th = xm_ref.shape[1]
    wc = xm_ref.shape[3]
    c2 = xm_ref.shape[4]
    wo = wc - 1
    coutp = o_ref.shape[3]

    # (th+1, 2, Wc, C2): tile rows plus the one halo row-pair.
    x_all = jnp.concatenate([xm_ref[0], xh_ref[0]], axis=0)
    # Input rows 2*ho + kh for kh = 0, 1, 2 — unit-stride slices thanks to the
    # (row-pair, parity) packing done (for free) in the wrapper.
    rows = (x_all[0:th, 0], x_all[0:th, 1], x_all[1:th + 1, 0])  # each (th, Wc, C2)

    acc = jnp.zeros((th * wo, coutp), jnp.float32)
    for kh in range(3):
        r = rows[kh]
        # columns 2*wo, 2*wo+1  (kw = 0, 1) packed in the lane dim
        a = r[:, 0:wo, :].reshape(th * wo, c2)
        # columns 2*wo+2 (kw = 2); the unused +3 column is zeroed in the weight
        b = r[:, 1:wo + 1, :].reshape(th * wo, c2)
        acc = acc + jnp.dot(a, w_ref[kh, 0], preferred_element_type=jnp.float32)
        acc = acc + jnp.dot(b, w_ref[kh, 1], preferred_element_type=jnp.float32)

    out = acc + b_ref[...]                                  # f32 bias add
    o_ref[...] = out.reshape(1, th, wo, coutp).astype(o_ref.dtype)


def _pick_block_rows(Ho, Wo, Wc, C2, Coutp, vmem_budget_bytes=24 * 1024 * 1024):
    """Pick output rows per tile: target ~2048 matmul rows, shrink to fit VMEM."""
    th = max(1, min(Ho, pl.cdiv(2048, Wo)))

    def vmem_bytes(t):
        lane_c2 = _round_up(max(C2, 1), 128)
        sub_wc = _round_up(Wc, 16)                 # bf16 sublane tile
        x_main = t * 2 * sub_wc * lane_c2 * 2
        x_halo = 1 * 2 * sub_wc * lane_c2 * 2
        o_tile = t * _round_up(Wo, 8) * Coutp * 4
        w_b = 3 * 2 * _round_up(C2, 16) * Coutp * 2 + _round_up(Coutp, 128) * 4
        # 2x for double buffering + ~3x tile-sized in-kernel temporaries
        return 2 * (x_main + x_halo + o_tile + w_b) + 3 * (x_main + o_tile)

    while th > 1 and vmem_bytes(th) > vmem_budget_bytes:
        th = (th + 1) // 2
    return th


@functools.partial(jax.jit, static_argnames=("block_rows",))
def dw_sample(x, weight, bias, *, block_rows=None):
    """DwSample forward.

    x:      (N, Cin, H, W)    NCHW (PyTorch convention)
    weight: (Cout, Cin, 3, 3) OIHW conv weight
    bias:   (Cout,)
    returns (N, Cout, Ho, Wo) NCHW, dtype of x
    """
    N, Cin, H, W = x.shape
    Cout = weight.shape[0]
    Ho = (H - 2) // 2 + 1            # = floor((H+1-3)/2) + 1
    Wo = (W - 2) // 2 + 1

    C2 = 2 * Cin                      # column-pair packed channels (lane dim)
    Wc = Wo + 1                       # column pairs incl. +1 halo pair
    Coutp = _round_up(Cout, 128)      # lane-dense output channels

    th = block_rows if block_rows is not None else _pick_block_rows(Ho, Wo, Wc, C2, Coutp)
    nti = pl.cdiv(Ho, th)
    HP2 = nti * th + 1                # row pairs incl. +1 halo pair
    Hpad, Wpad = 2 * HP2, 2 * Wc      # covers the F.pad(0,1,0,1) zeros + tiling pad

    # ---- layout-only prep (fuses into one pad/convert in XLA) -----------------
    # TODO(synk): if the surrounding model is kept NHWC/bf16, this transpose and
    # cast disappear entirely.
    x_nhwc = jnp.transpose(x, (0, 2, 3, 1))
    x_p = jnp.pad(x_nhwc, ((0, 0), (0, Hpad - H), (0, Wpad - W), (0, 0)))
    # Free, contiguous reshape: (N, Hpad, Wpad, Cin) -> (N, row_pair, 2, col_pair, 2*Cin)
    xp = x_p.reshape(N, HP2, 2, Wc, C2).astype(jnp.bfloat16)

    # Weights -> (kh, term, 2*Cin, Coutp):
    #   term 0 handles kw=0,1 (both halves of the packed lane dim),
    #   term 1 handles kw=2 (second Cin half zeroed so the +3 column is ignored).
    w_t = jnp.transpose(weight, (2, 3, 1, 0))                       # (3, 3, Cin, Cout)
    wa = w_t[:, 0:2, :, :].reshape(3, C2, Cout)
    wb = jnp.concatenate([w_t[:, 2, :, :],
                          jnp.zeros((3, Cin, Cout), w_t.dtype)], axis=1)
    w_all = jnp.stack([wa, wb], axis=1)                             # (3, 2, C2, Cout)
    w_all = jnp.pad(w_all, ((0, 0), (0, 0), (0, 0), (0, Coutp - Cout)))
    w_all = w_all.astype(jnp.bfloat16)
    b2 = jnp.pad(bias.astype(jnp.float32), (0, Coutp - Cout)).reshape(1, Coutp)

    flops = 2 * N * Ho * Wo * Cout * 9 * Cin
    bytes_accessed = (xp.size * 2 + w_all.size * 2 + b2.size * 4
                      + N * nti * th * Wo * Coutp * 4)

    out = pl.pallas_call(
        _dwsample_kernel,
        out_shape=jax.ShapeDtypeStruct((N, nti * th, Wo, Coutp), x.dtype),
        grid=(N, nti),
        in_specs=[
            # main tile: row pairs [i*th, i*th + th)
            pl.BlockSpec((1, th, 2, Wc, C2), lambda n, i: (n, i, 0, 0, 0)),
            # halo: the single row pair i*th + th (same array, thin window)
            pl.BlockSpec((1, 1, 2, Wc, C2), lambda n, i: (n, (i + 1) * th, 0, 0, 0)),
            # weight / bias: constant block index -> fetched once, stays resident
            pl.BlockSpec((3, 2, C2, Coutp), lambda n, i: (0, 0, 0, 0)),
            pl.BlockSpec((1, Coutp), lambda n, i: (0, 0)),
        ],
        out_specs=pl.BlockSpec((1, th, Wo, Coutp), lambda n, i: (n, i, 0, 0)),
        compiler_params=pltpu.CompilerParams(
            dimension_semantics=("parallel", "parallel"),
            vmem_limit_bytes=32 * 1024 * 1024,
        ),
        cost_estimate=pl.CostEstimate(
            flops=flops, transcendentals=0, bytes_accessed=bytes_accessed),
    )(xp, xp, w_all, b2)

    out = out[:, :Ho, :, :Cout]                 # drop row-tile pad + Cout lane pad
    return jnp.transpose(out, (0, 3, 1, 2))     # back to NCHW


if __name__ == "__main__":
    key = jax.random.PRNGKey(0)
    kx, kw, kb = jax.random.split(key, 3)

    # small shapes consistent with the module
    N, Cin, H, W = 2, 4, 16, 16
    Cout = Cin  # DwSample default: out_dim = in_dim

    x = jax.random.normal(kx, (N, Cin, H, W), dtype=jnp.float32)

    fan_in = Cin * 3 * 3
    bound = 1.0 / (fan_in ** 0.5)
    weight = jax.random.uniform(kw, (Cout, Cin, 3, 3), jnp.float32, -bound, bound)
    bias = jax.random.uniform(kb, (Cout,), jnp.float32, -bound, bound)

    y = jax.block_until_ready(dw_sample(x, weight, bias))

    # reference: same asymmetric pad + stride-2 VALID conv via XLA (f32)
    x_pad_ref = jnp.pad(x, ((0, 0), (0, 0), (0, 1), (0, 1)))
    ref = jax.lax.conv_general_dilated(
        x_pad_ref, weight, window_strides=(2, 2), padding="VALID",
        dimension_numbers=("NCHW", "OIHW", "NCHW"),
        precision=jax.lax.Precision.HIGHEST,
        preferred_element_type=jnp.float32,
    ) + bias.reshape(1, Cout, 1, 1)

    Ho = (H - 2) // 2 + 1
    Wo = (W - 2) // 2 + 1
    assert y.shape == (N, Cout, Ho, Wo), y.shape
    # bf16-streamed operands -> slightly looser tolerance than a pure-f32 check
    assert jnp.allclose(y, ref, atol=2e-2, rtol=2e-2), float(jnp.max(jnp.abs(y - ref)))
    print("KERNEL_OK")
</pallas_src>

<mosaic_0001>
module attributes {stable_mosaic.version = 11 : i64} {
  func.func @_dwsample_kernel(%arg0: i32, %arg1: i32, %arg2: memref<1x8x2x9x8xbf16, #tpu.memory_space<vmem>>, %arg3: memref<1x1x2x9x8xbf16, #tpu.memory_space<vmem>>, %arg4: memref<3x2x8x128xbf16, #tpu.memory_space<vmem>>, %arg5: memref<1x128xf32, #tpu.memory_space<vmem>>, %arg6: memref<1x8x8x128xf32, #tpu.memory_space<vmem>>) attributes {dimension_semantics = [#tpu.dimension_semantics<parallel>, #tpu.dimension_semantics<parallel>], iteration_bounds = array<i64: 2, 1>, scalar_prefetch = 0 : i64, scratch_operands = 0 : i64, tpu.core_type = #tpu.core_type<tc>, window_params = [{transform_indices = @transform_0, window_bounds = array<i64: 1, 8, 2, 9, 8>}, {transform_indices = @transform_1, window_bounds = array<i64: 1, 1, 2, 9, 8>}, {pipeline_mode = #tpu.pipeline_mode<synchronous>, transform_indices = @transform_2, window_bounds = array<i64: 3, 2, 8, 128>}, {pipeline_mode = #tpu.pipeline_mode<synchronous>, transform_indices = @transform_3, window_bounds = array<i64: 1, 128>}, {transform_indices = @transform_4, window_bounds = array<i64: 1, 8, 8, 128>}]} {
    %c0 = arith.constant 0 : index
    %c0_0 = arith.constant 0 : index
    %c0_1 = arith.constant 0 : index
    %c0_2 = arith.constant 0 : index
    %c0_3 = arith.constant 0 : index
    %0 = vector.load %arg2[%c0, %c0_0, %c0_1, %c0_2, %c0_3] : memref<1x8x2x9x8xbf16, #tpu.memory_space<vmem>>, vector<1x8x2x9x8xbf16>
    %1 = vector.shape_cast %0 : vector<1x8x2x9x8xbf16> to vector<8x2x9x8xbf16>
    %c0_4 = arith.constant 0 : index
    %c0_5 = arith.constant 0 : index
    %c0_6 = arith.constant 0 : index
    %c0_7 = arith.constant 0 : index
    %c0_8 = arith.constant 0 : index
    %2 = vector.load %arg3[%c0_4, %c0_5, %c0_6, %c0_7, %c0_8] : memref<1x1x2x9x8xbf16, #tpu.memory_space<vmem>>, vector<1x1x2x9x8xbf16>
    %3 = vector.shape_cast %2 : vector<1x1x2x9x8xbf16> to vector<1x2x9x8xbf16>
    %4 = tpu.concatenate %1, %3 in 0 : vector<8x2x9x8xbf16>, vector<1x2x9x8xbf16> -> vector<9x2x9x8xbf16>
    %5 = vector.extract_strided_slice %4 {offsets = [0, 0, 0, 0], sizes = [8, 1, 9, 8], strides = [1, 1, 1, 1]} : vector<9x2x9x8xbf16> to vector<8x1x9x8xbf16>
    %6 = vector.shape_cast %5 : vector<8x1x9x8xbf16> to vector<8x9x8xbf16>
    %7 = vector.extract_strided_slice %4 {offsets = [0, 1, 0, 0], sizes = [8, 1, 9, 8], strides = [1, 1, 1, 1]} : vector<9x2x9x8xbf16> to vector<8x1x9x8xbf16>
    %8 = vector.shape_cast %7 : vector<8x1x9x8xbf16> to vector<8x9x8xbf16>
    %9 = vector.extract_strided_slice %4 {offsets = [1, 0, 0, 0], sizes = [8, 1, 9, 8], strides = [1, 1, 1, 1]} : vector<9x2x9x8xbf16> to vector<8x1x9x8xbf16>
    %10 = vector.shape_cast %9 : vector<8x1x9x8xbf16> to vector<8x9x8xbf16>
    %cst = arith.constant 0.000000e+00 : f32
    %11 = vector.broadcast %cst : f32 to vector<64x128xf32>
    %12 = vector.extract_strided_slice %6 {offsets = [0, 0, 0], sizes = [8, 8, 8], strides = [1, 1, 1]} : vector<8x9x8xbf16> to vector<8x8x8xbf16>
    %13 = vector.shape_cast %12 : vector<8x8x8xbf16> to vector<64x8xbf16>
    %14 = vector.extract_strided_slice %6 {offsets = [0, 1, 0], sizes = [8, 8, 8], strides = [1, 1, 1]} : vector<8x9x8xbf16> to vector<8x8x8xbf16>
    %15 = vector.shape_cast %14 : vector<8x8x8xbf16> to vector<64x8xbf16>
    %c0_9 = arith.constant 0 : index
    %c0_10 = arith.constant 0 : index
    %c0_11 = arith.constant 0 : index
    %c0_12 = arith.constant 0 : index
    %16 = vector.load %arg4[%c0_9, %c0_10, %c0_11, %c0_12] : memref<3x2x8x128xbf16, #tpu.memory_space<vmem>>, vector<1x1x8x128xbf16>
    %17 = vector.shape_cast %16 : vector<1x1x8x128xbf16> to vector<8x128xbf16>
    %cst_13 = arith.constant dense<0.000000e+00> : vector<64x128xf32>
    %18 = tpu.matmul %13, %17, %cst_13 {dimension_numbers = #tpu.dot_dimension_numbers<[1], [0], [0], [1], [0, 0, 1, 1], [], []>} : vector<64x8xbf16>, vector<8x128xbf16>, vector<64x128xf32> -> vector<64x128xf32>
    %19 = arith.addf %11, %18 : vector<64x128xf32>
    %c0_14 = arith.constant 0 : index
    %c1 = arith.constant 1 : index
    %c0_15 = arith.constant 0 : index
    %c0_16 = arith.constant 0 : index
    %20 = vector.load %arg4[%c0_14, %c1, %c0_15, %c0_16] : memref<3x2x8x128xbf16, #tpu.memory_space<vmem>>, vector<1x1x8x128xbf16>
    %21 = vector.shape_cast %20 : vector<1x1x8x128xbf16> to vector<8x128xbf16>
    %cst_17 = arith.constant dense<0.000000e+00> : vector<64x128xf32>
    %22 = tpu.matmul %15, %21, %cst_17 {dimension_numbers = #tpu.dot_dimension_numbers<[1], [0], [0], [1], [0, 0, 1, 1], [], []>} : vector<64x8xbf16>, vector<8x128xbf16>, vector<64x128xf32> -> vector<64x128xf32>
    %23 = arith.addf %19, %22 : vector<64x128xf32>
    %24 = vector.extract_strided_slice %8 {offsets = [0, 0, 0], sizes = [8, 8, 8], strides = [1, 1, 1]} : vector<8x9x8xbf16> to vector<8x8x8xbf16>
    %25 = vector.shape_cast %24 : vector<8x8x8xbf16> to vector<64x8xbf16>
    %26 = vector.extract_strided_slice %8 {offsets = [0, 1, 0], sizes = [8, 8, 8], strides = [1, 1, 1]} : vector<8x9x8xbf16> to vector<8x8x8xbf16>
    %27 = vector.shape_cast %26 : vector<8x8x8xbf16> to vector<64x8xbf16>
    %c1_18 = arith.constant 1 : index
    %c0_19 = arith.constant 0 : index
    %c0_20 = arith.constant 0 : index
    %c0_21 = arith.constant 0 : index
    %28 = vector.load %arg4[%c1_18, %c0_19, %c0_20, %c0_21] : memref<3x2x8x128xbf16, #tpu.memory_space<vmem>>, vector<1x1x8x128xbf16>
    %29 = vector.shape_cast %28 : vector<1x1x8x128xbf16> to vector<8x128xbf16>
    %cst_22 = arith.constant dense<0.000000e+00> : vector<64x128xf32>
    %30 = tpu.matmul %25, %29, %cst_22 {dimension_numbers = #tpu.dot_dimension_numbers<[1], [0], [0], [1], [0, 0, 1, 1], [], []>} : vector<64x8xbf16>, vector<8x128xbf16>, vector<64x128xf32> -> vector<64x128xf32>
    %31 = arith.addf %23, %30 : vector<64x128xf32>
    %c1_23 = arith.constant 1 : index
    %c1_24 = arith.constant 1 : index
    %c0_25 = arith.constant 0 : index
    %c0_26 = arith.constant 0 : index
    %32 = vector.load %arg4[%c1_23, %c1_24, %c0_25, %c0_26] : memref<3x2x8x128xbf16, #tpu.memory_space<vmem>>, vector<1x1x8x128xbf16>
    %33 = vector.shape_cast %32 : vector<1x1x8x128xbf16> to vector<8x128xbf16>
    %cst_27 = arith.constant dense<0.000000e+00> : vector<64x128xf32>
    %34 = tpu.matmul %27, %33, %cst_27 {dimension_numbers = #tpu.dot_dimension_numbers<[1], [0], [0], [1], [0, 0, 1, 1], [], []>} : vector<64x8xbf16>, vector<8x128xbf16>, vector<64x128xf32> -> vector<64x128xf32>
    %35 = arith.addf %31, %34 : vector<64x128xf32>
    %36 = vector.extract_strided_slice %10 {offsets = [0, 0, 0], sizes = [8, 8, 8], strides = [1, 1, 1]} : vector<8x9x8xbf16> to vector<8x8x8xbf16>
    %37 = vector.shape_cast %36 : vector<8x8x8xbf16> to vector<64x8xbf16>
    %38 = vector.extract_strided_slice %10 {offsets = [0, 1, 0], sizes = [8, 8, 8], strides = [1, 1, 1]} : vector<8x9x8xbf16> to vector<8x8x8xbf16>
    %39 = vector.shape_cast %38 : vector<8x8x8xbf16> to vector<64x8xbf16>
    %c2 = arith.constant 2 : index
    %c0_28 = arith.constant 0 : index
    %c0_29 = arith.constant 0 : index
    %c0_30 = arith.constant 0 : index
    %40 = vector.load %arg4[%c2, %c0_28, %c0_29, %c0_30] : memref<3x2x8x128xbf16, #tpu.memory_space<vmem>>, vector<1x1x8x128xbf16>
    %41 = vector.shape_cast %40 : vector<1x1x8x128xbf16> to vector<8x128xbf16>
    %cst_31 = arith.constant dense<0.000000e+00> : vector<64x128xf32>
    %42 = tpu.matmul %37, %41, %cst_31 {dimension_numbers = #tpu.dot_dimension_numbers<[1], [0], [0], [1], [0, 0, 1, 1], [], []>} : vector<64x8xbf16>, vector<8x128xbf16>, vector<64x128xf32> -> vector<64x128xf32>
    %43 = arith.addf %35, %42 : vector<64x128xf32>
    %c2_32 = arith.constant 2 : index
    %c1_33 = arith.constant 1 : index
    %c0_34 = arith.constant 0 : index
    %c0_35 = arith.constant 0 : index
    %44 = vector.load %arg4[%c2_32, %c1_33, %c0_34, %c0_35] : memref<3x2x8x128xbf16, #tpu.memory_space<vmem>>, vector<1x1x8x128xbf16>
    %45 = vector.shape_cast %44 : vector<1x1x8x128xbf16> to vector<8x128xbf16>
    %cst_36 = arith.constant dense<0.000000e+00> : vector<64x128xf32>
    %46 = tpu.matmul %39, %45, %cst_36 {dimension_numbers = #tpu.dot_dimension_numbers<[1], [0], [0], [1], [0, 0, 1, 1], [], []>} : vector<64x8xbf16>, vector<8x128xbf16>, vector<64x128xf32> -> vector<64x128xf32>
    %47 = arith.addf %43, %46 : vector<64x128xf32>
    %c0_37 = arith.constant 0 : index
    %c0_38 = arith.constant 0 : index
    %48 = vector.load %arg5[%c0_37, %c0_38] : memref<1x128xf32, #tpu.memory_space<vmem>>, vector<1x128xf32>
    %49 = vector.broadcast %48 : vector<1x128xf32> to vector<64x128xf32>
    %50 = arith.addf %47, %49 : vector<64x128xf32>
    %51 = vector.shape_cast %50 : vector<64x128xf32> to vector<1x8x8x128xf32>
    %c0_39 = arith.constant 0 : index
    %c0_40 = arith.constant 0 : index
    %c0_41 = arith.constant 0 : index
    %c0_42 = arith.constant 0 : index
    %52 = vector.load %arg6[%c0_39, %c0_40, %c0_41, %c0_42] : memref<1x8x8x128xf32, #tpu.memory_space<vmem>>, vector<1x8x8x128xf32>
    tpu.vector_store %arg6[%c0_39, %c0_40, %c0_41, %c0_42], %51 {strides = array<i32>} : memref<1x8x8x128xf32, #tpu.memory_space<vmem>>, vector<1x8x8x128xf32>,
    return
  }
  func.func @transform_0(%arg0: i32, %arg1: i32) -> (i32, i32, i32, i32, i32) {
    %c0_i32 = arith.constant 0 : i32
    %c0_i32_0 = arith.constant 0 : i32
    %c0_i32_1 = arith.constant 0 : i32
    %c0_i32_2 = arith.constant 0 : i32
    return %arg0, %arg1, %c0_i32, %c0_i32_0, %c0_i32_1 : i32, i32, i32, i32, i32
  }
  func.func @transform_1(%arg0: i32, %arg1: i32) -> (i32, i32, i32, i32, i32) {
    %c1_i32 = arith.constant 1 : i32
    %0 = arith.addi %arg1, %c1_i32 : i32
    %c8_i32 = arith.constant 8 : i32
    %1 = arith.muli %0, %c8_i32 : i32
    %c0_i32 = arith.constant 0 : i32
    %c0_i32_0 = arith.constant 0 : i32
    %c0_i32_1 = arith.constant 0 : i32
    %c0_i32_2 = arith.constant 0 : i32
    return %arg0, %1, %c0_i32, %c0_i32_0, %c0_i32_1 : i32, i32, i32, i32, i32
  }
  func.func @transform_2(%arg0: i32, %arg1: i32) -> (i32, i32, i32, i32) {
    %c0_i32 = arith.constant 0 : i32
    %c0_i32_0 = arith.constant 0 : i32
    %c0_i32_1 = arith.constant 0 : i32
    %c0_i32_2 = arith.constant 0 : i32
    %c0_i32_3 = arith.constant 0 : i32
    return %c0_i32, %c0_i32_0, %c0_i32_1, %c0_i32_2 : i32, i32, i32, i32
  }
  func.func @transform_3(%arg0: i32, %arg1: i32) -> (i32, i32) {
    %c0_i32 = arith.constant 0 : i32
    %c0_i32_0 = arith.constant 0 : i32
    %c0_i32_1 = arith.constant 0 : i32
    return %c0_i32, %c0_i32_0 : i32, i32
  }
  func.func @transform_4(%arg0: i32, %arg1: i32) -> (i32, i32, i32, i32) {
    %c0_i32 = arith.constant 0 : i32
    %c0_i32_0 = arith.constant 0 : i32
    %c0_i32_1 = arith.constant 0 : i32
    return %arg0, %arg1, %c0_i32, %c0_i32_0 : i32, i32, i32, i32
  }
}

</mosaic_0001>

<llo_original>
// kernel: dw_sample.1
$region0: #{dw_sample.1}
  #allocation0 [shape = 'u32[]', space=smem, size = 0x4, offset = 0x4, fixed_abs, tag = 'smem constant byte address 0x4 - core index']
  #allocation1 [shape = 'u32[144,128]{1,0:T(1,128)}', space=vmem, size = 0x12000, scoped, tag = 'internal scratch']
  %s0 = inlined_call_operand.vmem [shape: bf16[2,9,2,9,8], index: 0, kind: input, shape index: {}, may-alias: {0,1}]
  %s1 = inlined_call_operand.vmem [shape: bf16[2,9,2,9,8], index: 1, kind: input, shape index: {}, may-alias: {0,1}]
  %s2 = inlined_call_operand.vmem [shape: bf16[3,2,8,128], index: 2, kind: input, shape index: {}]
  %s3 = inlined_call_operand.vmem [shape: f32[1,128], index: 3, kind: input, shape index: {}]
  %s4 = inlined_call_operand.vmem [shape: f32[2,8,8,128], index: 4, kind: output, shape index: {}]
  %s5 = sld [smem:[#allocation0]]
  $region49: #{dw_sample.1} parent=0
    _
  %s7 = ssub.s32 1, %s5
  %s8 = scalar_select 0, %s7, %s5
  loop: start=0, step=1, limit=4
  $region2: #{dw_sample.1} parent=0 // loop_pre_header
    _
  $region3: #{dw_sample.1} parent=0 // loop_header
    %s10 = sphi 0, %s14
    %p11 = scmp.ge.s32.totalorder %s10, 4
    %s17 = sphi 0, %s29
    %s18 = sphi 0, %s25
    %s19 = sphi 0, %s17
    %s20 = sphi 0, %s18
    %s21 = sphi 0, %s19
    %s22 = sphi 0, %s20
    %s34 = sphi 0, %s36
    %s37 = sphi 0, %s34
    %s38 = sphi 0, %s37
    %s54 = sphi 0, %s38
    %s66 = sphi 0, %s68
    %s69 = sphi 0, %s66
    %s70 = sphi 0, %s69
    %s86 = sphi 0, %s70
    %s90 = sphi 0, %s90
    %s92 = sphi 0, %s90
    %s93 = sphi 0, %s92
    %s107 = sphi 0, %s93
    %s111 = sphi 0, %s111
    %s113 = sphi 0, %s111
    %s114 = sphi 0, %s113
    %s128 = sphi 0, %s114
    %s136 = sphi 0, %s138
    %s139 = sphi 0, %s136
    %s140 = sphi 0, %s139
    %s156 = sphi 0, %s140
  $region4: #{dw_sample.1} parent=0 // loop_header_branch
    %13 = sbr.rel (%p11) target = $region8
  $region5: #{dw_sample.1} parent=0 // loop_body
    %s15 = ssub.s32 %s10, 1
    %s16 = ssub.s32 %s10, 2
    %s23 = sadd.s32 1, %s18
    %p24 = scmp.ge.s32.totalorder %s23, 1
    %s25 = scalar_select %p24, 0, %s23
    %s26 = sadd.s32 1, %s17
    %s27 = scalar_select %p24, %s26, %s17
    %p28 = scmp.ge.s32.totalorder %s27, 2
    %s29 = scalar_select %p28, 0, %s27
    %s30 = ssub.s32 %s17, %s29
    %s31 = ssub.s32 %s18, %s25
    %s32 = sor.u32 %s30, %s31
    %p33 = scmp.eq.s32.totalorder %s32, 0
    %s35 = sadd.s32 %s34, 1
    %s36 = scalar_select %p33, %s34, %s35
    %p39 = pneg %p33
    %p40 = scmp.eq.s32.totalorder %s10, 1
    %p41 = por %p39, %p40
    %p42 = scmp.ne.s32.totalorder %s34, %s37
    %p43 = scmp.eq.s32.totalorder %s10, 0
    %p44 = por %p42, %p43
    %p45 = scmp.ne.s32.totalorder %s34, %s37
    %p46 = scmp.eq.s32.totalorder %s15, 1
    %p47 = por %p45, %p46
    %p48 = scmp.ne.s32.totalorder %s37, %s38
    %p49 = scmp.eq.s32.totalorder %s15, 0
    %p50 = por %p48, %p49
    %p51 = scmp.ne.s32.totalorder %s37, %s38
    %p52 = scmp.eq.s32.totalorder %s16, 1
    %p53 = por %p51, %p52
    %p55 = scmp.ne.s32.totalorder %s38, %s54
    %p56 = scmp.eq.s32.totalorder %s16, 0
    %p57 = por %p55, %p56
    %s58 = sadd.s32 %s18, 1
    %s59 = smul.u32 %s58, 8
    %s60 = sadd.s32 %s25, 1
    %s61 = smul.u32 %s60, 8
    %s62 = ssub.s32 %s17, %s29
    %s63 = ssub.s32 %s59, %s61
    %s64 = sor.u32 %s62, %s63
    %p65 = scmp.eq.s32.totalorder %s64, 0
    %s67 = sadd.s32 %s66, 1
    %s68 = scalar_select %p65, %s66, %s67
    %p71 = pneg %p65
    %p72 = scmp.eq.s32.totalorder %s10, 1
    %p73 = por %p71, %p72
    %p74 = scmp.ne.s32.totalorder %s66, %s69
    %p75 = scmp.eq.s32.totalorder %s10, 0
    %p76 = por %p74, %p75
    %p77 = scmp.ne.s32.totalorder %s66, %s69
    %p78 = scmp.eq.s32.totalorder %s15, 1
    %p79 = por %p77, %p78
    %p80 = scmp.ne.s32.totalorder %s69, %s70
    %p81 = scmp.eq.s32.totalorder %s15, 0
    %p82 = por %p80, %p81
    %p83 = scmp.ne.s32.totalorder %s69, %s70
    %p84 = scmp.eq.s32.totalorder %s16, 1
    %p85 = por %p83, %p84
    %p87 = scmp.ne.s32.totalorder %s70, %s86
    %p88 = scmp.eq.s32.totalorder %s16, 0
    %p89 = por %p87, %p88
    %s91 = sadd.s32 %s90, 1
    %p94 = scmp.eq.s32.totalorder %s10, 1
    %p95 = scmp.ne.s32.totalorder %s90, %s92
    %p96 = scmp.eq.s32.totalorder %s10, 0
    %p97 = por %p95, %p96
    %p98 = scmp.ne.s32.totalorder %s90, %s92
    %p99 = scmp.eq.s32.totalorder %s15, 1
    %p100 = por %p98, %p99
    %p101 = scmp.ne.s32.totalorder %s92, %s93
    %p102 = scmp.eq.s32.totalorder %s15, 0
    %p103 = por %p101, %p102
    %p104 = scmp.ne.s32.totalorder %s92, %s93
    %p105 = scmp.eq.s32.totalorder %s16, 1
    %p106 = por %p104, %p105
    %p108 = scmp.ne.s32.totalorder %s93, %s107
    %p109 = scmp.eq.s32.totalorder %s16, 0
    %p110 = por %p108, %p109
    %s112 = sadd.s32 %s111, 1
    %p115 = scmp.eq.s32.totalorder %s10, 1
    %p116 = scmp.ne.s32.totalorder %s111, %s113
    %p117 = scmp.eq.s32.totalorder %s10, 0
    %p118 = por %p116, %p117
    %p119 = scmp.ne.s32.totalorder %s111, %s113
    %p120 = scmp.eq.s32.totalorder %s15, 1
    %p121 = por %p119, %p120
    %p122 = scmp.ne.s32.totalorder %s113, %s114
    %p123 = scmp.eq.s32.totalorder %s15, 0
    %p124 = por %p122, %p123
    %p125 = scmp.ne.s32.totalorder %s113, %s114
    %p126 = scmp.eq.s32.totalorder %s16, 1
    %p127 = por %p125, %p126
    %p129 = scmp.ne.s32.totalorder %s114, %s128
    %p130 = scmp.eq.s32.totalorder %s16, 0
    %p131 = por %p129, %p130
    %s132 = ssub.s32 %s17, %s29
    %s133 = ssub.s32 %s18, %s25
    %s134 = sor.u32 %s132, %s133
    %p135 = scmp.eq.s32.totalorder %s134, 0
    %s137 = sadd.s32 %s136, 1
    %s138 = scalar_select %p135, %s136, %s137
    %p141 = pneg %p135
    %p142 = scmp.eq.s32.totalorder %s10, 1
    %p143 = por %p141, %p142
    %p144 = scmp.ne.s32.totalorder %s136, %s139
    %p145 = scmp.eq.s32.totalorder %s10, 0
    %p146 = por %p144, %p145
    %p147 = scmp.ne.s32.totalorder %s136, %s139
    %p148 = scmp.eq.s32.totalorder %s15, 1
    %p149 = por %p147, %p148
    %p150 = scmp.ne.s32.totalorder %s139, %s140
    %p151 = scmp.eq.s32.totalorder %s15, 0
    %p152 = por %p150, %p151
    %p153 = scmp.ne.s32.totalorder %s139, %s140
    %p154 = scmp.eq.s32.totalorder %s16, 1
    %p155 = por %p153, %p154
    %p157 = scmp.ne.s32.totalorder %s140, %s156
    %p158 = scmp.eq.s32.totalorder %s16, 0
    %p159 = por %p157, %p158
    %p160 = scmp.le.s32.totalorder 1, %s10
    %p161 = scmp.lt.s32.totalorder %s10, 3
    %p162 = pnand %p160, %p161
    %p163 = pneg %p162
    // Predicated region
    $region9: #{dw_sample.1} parent=5 // pred_check
      _
    $region10: #{dw_sample.1} parent=5 // pred_check_branch
      %165 = sbr.rel (%p162) target = $region12
    $region11: #{dw_sample.1} parent=5 // pred_region
      %s166 = ssub.s32 %s10, 1
      // Predicated region
      $region13: #{dw_sample.1} parent=11 // pred_check
        %p167 = pneg %p103
      $region14: #{dw_sample.1} parent=11 // pred_check_branch
        %169 = sbr.rel (%p167) target = $region16
      $region15: #{dw_sample.1} parent=11 // pred_region
        _
      $region16: #{dw_sample.1} parent=11 // pred_fallthru
        _
      // Predicated region
      $region17: #{dw_sample.1} parent=11 // pred_check
        %p170 = pneg %p124
      $region18: #{dw_sample.1} parent=11 // pred_check_branch
        %172 = sbr.rel (%p170) target = $region20
      $region19: #{dw_sample.1} parent=11 // pred_region
        _
      $region20: #{dw_sample.1} parent=11 // pred_fallthru
        _
    $region12: #{dw_sample.1} parent=5 // pred_fallthru
      _
    %p173 = scmp.lt.s32.totalorder %s10, 2
    // Predicated region
    $region21: #{dw_sample.1} parent=5 // pred_check
      %p174 = pneg %p173
    $region22: #{dw_sample.1} parent=5 // pred_check_branch
      %176 = sbr.rel (%p174) target = $region24
    $region23: #{dw_sample.1} parent=5 // pred_region
      // Predicated region
      $region25: #{dw_sample.1} parent=23 // pred_check
        %p177 = pneg %p44
      $region26: #{dw_sample.1} parent=23 // pred_check_branch
        %179 = sbr.rel (%p177) target = $region28
      $region27: #{dw_sample.1} parent=23 // pred_region
        %s180 = smul.u32 8, %s18
        %s181 = ssub.s32 9, %s180
        %p182 = scmp.lt.s32.totalorder %s181, 8
        %s183 = scalar_select %p182, %s181, 8
        %s184 = smul.u32 64, %s183
        %s185 = smul.u32 %s184, 2
        %s186 = smul.u32 %s185, 2
        %p187 = scmp.lt.s32.totalorder %s17, 1
        %s188 = scalar_select %p187, %s17, 1
        %p189 = scmp.lt.s32.totalorder %s180, 8
        %s190 = scalar_select %p189, %s180, 8
        %s191 = smul.addr %s190, 4
        %s192 = smul.addr %s188, 36
        %s193 = sadd.s32 %s191, %s192
        %s194 = smul.addr %s193, 4
        %s195 = scalar_lea.vmem %s0, %s194
        %s196 = smul.u32 8, %s18
        %s197 = ssub.s32 9, %s196
        %p198 = scmp.lt.s32.totalorder %s197, 8
        %s199 = scalar_select %p198, %s197, 8
        %s200 = smul.u32 64, %s199
        %s201 = smul.u32 %s200, 2
        %s202 = smul.u32 %s201, 2
      $region28: #{dw_sample.1} parent=23 // pred_fallthru
        _
      // Predicated region
      $region29: #{dw_sample.1} parent=23 // pred_check
        %p203 = pneg %p76
      $region30: #{dw_sample.1} parent=23 // pred_check_branch
        %205 = sbr.rel (%p203) target = $region32
      $region31: #{dw_sample.1} parent=23 // pred_region
        %s206 = sadd.s32 %s18, 1
        %s207 = smul.u32 %s206, 8
        %p208 = scmp.lt.s32.totalorder %s17, 1
        %s209 = scalar_select %p208, %s17, 1
        %p210 = scmp.lt.s32.totalorder %s207, 8
        %s211 = scalar_select %p210, %s207, 8
        %s212 = smul.addr %s211, 4
        %s213 = smul.addr %s209, 36
        %s214 = sadd.s32 %s212, %s213
        %s215 = smul.addr %s214, 4
        %s216 = scalar_lea.vmem %s1, %s215
        %s217 = sadd.s32 %s18, 1
        %s218 = smul.u32 %s217, 8
      $region32: #{dw_sample.1} parent=23 // pred_fallthru
        _
    $region24: #{dw_sample.1} parent=5 // pred_fallthru
      _
    %p219 = scmp.le.s32.totalorder 1, %s10
    %p220 = scmp.lt.s32.totalorder %s10, 3
    %p221 = pnand %p219, %p220
    %p222 = pneg %p221
    // Predicated region
    $region33: #{dw_sample.1} parent=5 // pred_check
      _
    $region34: #{dw_sample.1} parent=5 // pred_check_branch
      %224 = sbr.rel (%p221) target = $region36
    $region35: #{dw_sample.1} parent=5 // pred_region
      %s225 = ssub.s32 %s10, 1
      %s226 = smul.u32 8, %s20
      %s227 = ssub.s32 9, %s226
      %p228 = scmp.lt.s32.totalorder %s227, 8
      %s229 = scalar_select %p228, %s227, 8
      %s230 = smul.u32 64, %s229
      %s231 = smul.u32 %s230, 2
      %s232 = smul.u32 %s231, 2
      %p233 = scmp.lt.s32.totalorder %s19, 1
      %s234 = scalar_select %p233, %s19, 1
      %p235 = scmp.lt.s32.totalorder %s226, 8
      %s236 = scalar_select %p235, %s226, 8
      %s237 = smul.addr %s236, 4
      %s238 = smul.addr %s234, 36
      %s239 = sadd.s32 %s237, %s238
      %s240 = smul.addr %s239, 4
      %s241 = scalar_lea.vmem %s0, %s240
      %p242 = pneg %p50
      %p243 = pneg %p47
      %s244 = sadd.s32 %s20, 1
      %s245 = smul.u32 %s244, 8
      %p246 = scmp.lt.s32.totalorder %s19, 1
      %s247 = scalar_select %p246, %s19, 1
      %p248 = scmp.lt.s32.totalorder %s245, 8
      %s249 = scalar_select %p248, %s245, 8
      %s250 = smul.addr %s249, 4
      %s251 = smul.addr %s247, 36
      %s252 = sadd.s32 %s250, %s251
      %s253 = smul.addr %s252, 4
      %s254 = scalar_lea.vmem %s1, %s253
      %p255 = pneg %p82
      %p256 = pneg %p79
      %p257 = pneg %p103
      %p258 = pneg %p100
      %p259 = pneg %p124
      %p260 = pneg %p121
      %p261 = pneg %p152
      %p262 = pneg %p149
      %s263 = smul.u32 8, %s20
      %p264 = scmp.lt.s32.totalorder %s19, 1
      %s265 = scalar_select %p264, %s19, 1
      %p266 = scmp.lt.s32.totalorder %s263, 7
      %s267 = scalar_select %p266, %s263, 7
      %s268 = smul.addr %s265, 8
      %s269 = sadd.s32 %s267, %s268
      %s270 = smul.addr %s269, 8
      %s271 = scalar_lea.vmem %s4, %s270
      %s272 = smul.u32 8, %s20
      %s273 = ssub.s32 9, %s272
      %p274 = scmp.lt.s32.totalorder %s273, 8
      %s275 = scalar_select %p274, %s273, 8
      %s276 = smul.u32 64, %s275
      %s277 = smul.u32 %s276, 2
      %s278 = smul.u32 %s277, 2
      %p279 = scmp.lt.s32.totalorder %s19, 1
      %s280 = scalar_select %p279, %s19, 1
      %p281 = scmp.lt.s32.totalorder %s272, 8
      %s282 = scalar_select %p281, %s272, 8
      %s283 = smul.addr %s282, 4
      %s284 = smul.addr %s280, 36
      %s285 = sadd.s32 %s283, %s284
      %s286 = smul.addr %s285, 4
      %s287 = scalar_lea.vmem %s0, %s286
      %s288 = smul.u32 8, %s20
      %s289 = ssub.s32 9, %s288
      %p290 = scmp.lt.s32.totalorder %s289, 8
      %s291 = scalar_select %p290, %s289, 8
      %s292 = smul.u32 64, %s291
      %s293 = smul.u32 %s292, 2
      %s294 = smul.u32 %s293, 2
      %s295 = sadd.s32 %s20, 1
      %s296 = smul.u32 %s295, 8
      %p297 = scmp.lt.s32.totalorder %s19, 1
      %s298 = scalar_select %p297, %s19, 1
      %p299 = scmp.lt.s32.totalorder %s296, 8
      %s300 = scalar_select %p299, %s296, 8
      %s301 = smul.addr %s300, 4
      %s302 = smul.addr %s298, 36
      %s303 = sadd.s32 %s301, %s302
      %s304 = smul.addr %s303, 4
      %s305 = scalar_lea.vmem %s1, %s304
      %s306 = sadd.s32 %s20, 1
      %s307 = smul.u32 %s306, 8
      %s308 = smul.u32 8, %s20
      %p309 = scmp.lt.s32.totalorder %s19, 1
      %s310 = scalar_select %p309, %s19, 1
      %p311 = scmp.lt.s32.totalorder %s308, 7
      %s312 = scalar_select %p311, %s308, 7
      %s313 = smul.addr %s310, 8
      %s314 = sadd.s32 %s312, %s313
      %s315 = smul.addr %s314, 8
      %s316 = scalar_lea.vmem %s4, %s315
      %s317 = smul.u32 8, %s20
      %v319 = vld [vmem:[%s287] sm:$0xf]
      %v320 = vld [vmem:[%s287 + $0x4] sm:$0x1]
      %v321 = vld [vmem:[%s287 + $0x8] sm:$0xf]
      %v322 = vld [vmem:[%s287 + $0xc] sm:$0x1]
      %v323 = vld [vmem:[%s287 + $0x10] sm:$0xf]
      %v324 = vld [vmem:[%s287 + $0x14] sm:$0x1]
      %v325 = vld [vmem:[%s287 + $0x18] sm:$0xf]
      %v326 = vld [vmem:[%s287 + $0x1c] sm:$0x1]
      %v327 = vld [vmem:[%s287 + $0x20] sm:$0xf]
      %v328 = vld [vmem:[%s287 + $0x24] sm:$0x1]
      %v329 = vld [vmem:[%s287 + $0x28] sm:$0xf]
      %v330 = vld [vmem:[%s287 + $0x2c] sm:$0x1]
      %v331 = vld [vmem:[%s287 + $0x30] sm:$0xf]
      %v332 = vld [vmem:[%s287 + $0x34] sm:$0x1]
      %v333 = vld [vmem:[%s287 + $0x38] sm:$0xf]
      %v334 = vld [vmem:[%s287 + $0x3c] sm:$0x1]
      %v335 = vld [vmem:[%s287 + $0x40] sm:$0xf]
      %v336 = vld [vmem:[%s287 + $0x44] sm:$0x1]
      %v337 = vld [vmem:[%s287 + $0x48] sm:$0xf]
      %v338 = vld [vmem:[%s287 + $0x4c] sm:$0x1]
      %v339 = vld [vmem:[%s287 + $0x50] sm:$0xf]
      %v340 = vld [vmem:[%s287 + $0x54] sm:$0x1]
      %v341 = vld [vmem:[%s287 + $0x58] sm:$0xf]
      %v342 = vld [vmem:[%s287 + $0x5c] sm:$0x1]
      %v343 = vld [vmem:[%s287 + $0x60] sm:$0xf]
      %v344 = vld [vmem:[%s287 + $0x64] sm:$0x1]
      %v345 = vld [vmem:[%s287 + $0x68] sm:$0xf]
      %v346 = vld [vmem:[%s287 + $0x6c] sm:$0x1]
      %v347 = vld [vmem:[%s287 + $0x70] sm:$0xf]
      %v348 = vld [vmem:[%s287 + $0x74] sm:$0x1]
      %v349 = vld [vmem:[%s287 + $0x78] sm:$0xf]
      %v350 = vld [vmem:[%s287 + $0x7c] sm:$0x1]
      %v351 = vld [vmem:[%s305] sm:$0xf]
      %v352 = vld [vmem:[%s305 + $0x4] sm:$0x1]
      %vm353 = vsmask.f32 3328
      %vm354 = vsmask.f32 7440
      %vm355 = vmor %vm353, %vm354
      %v357 = vshrl.u32 %v319, 16
      %v359 = vrot.slane %v357, 4
      %v360 = vshll.u32 %v319, 16
      %v362 = vrot.slane %v360, 5
      %v363 = vor.u32 %v359, %v362
      %v364 = vrot.slane %v363, 4
      %v366 = vshll.u32 %v320, 16
      %v368 = vrot.slane %v366, 5
      %v369 = vsel %vm355, %v364, %v368
      %v371 = vshrl.u32 %v323, 16
      %v373 = vrot.slane %v371, 4
      %v374 = vshll.u32 %v323, 16
      %v376 = vrot.slane %v374, 5
      %v377 = vor.u32 %v373, %v376
      %v378 = vrot.slane %v377, 4
      %v380 = vshll.u32 %v324, 16
      %v382 = vrot.slane %v380, 5
      %v383 = vsel %vm355, %v378, %v382
      %v385 = vshrl.u32 %v327, 16
      %v387 = vrot.slane %v385, 4
      %v388 = vshll.u32 %v327, 16
      %v390 = vrot.slane %v388, 5
      %v391 = vor.u32 %v387, %v390
      %v392 = vrot.slane %v391, 4
      %v394 = vshll.u32 %v328, 16
      %v396 = vrot.slane %v394, 5
      %v397 = vsel %vm355, %v392, %v396
      %v399 = vshrl.u32 %v331, 16
      %v401 = vrot.slane %v399, 4
      %v402 = vshll.u32 %v331, 16
      %v404 = vrot.slane %v402, 5
      %v405 = vor.u32 %v401, %v404
      %v406 = vrot.slane %v405, 4
      %v408 = vshll.u32 %v332, 16
      %v410 = vrot.slane %v408, 5
      %v411 = vsel %vm355, %v406, %v410
      %v413 = vshrl.u32 %v335, 16
      %v415 = vrot.slane %v413, 4
      %v416 = vshll.u32 %v335, 16
      %v418 = vrot.slane %v416, 5
      %v419 = vor.u32 %v415, %v418
      %v420 = vrot.slane %v419, 4
      %v422 = vshll.u32 %v336, 16
      %v424 = vrot.slane %v422, 5
      %v425 = vsel %vm355, %v420, %v424
      %v427 = vshrl.u32 %v339, 16
      %v429 = vrot.slane %v427, 4
      %v430 = vshll.u32 %v339, 16
      %v432 = vrot.slane %v430, 5
      %v433 = vor.u32 %v429, %v432
      %v434 = vrot.slane %v433, 4
      %v436 = vshll.u32 %v340, 16
      %v438 = vrot.slane %v436, 5
      %v439 = vsel %vm355, %v434, %v438
      %v441 = vshrl.u32 %v343, 16
      %v443 = vrot.slane %v441, 4
      %v444 = vshll.u32 %v343, 16
      %v446 = vrot.slane %v444, 5
      %v447 = vor.u32 %v443, %v446
      %v448 = vrot.slane %v447, 4
      %v450 = vshll.u32 %v344, 16
      %v452 = vrot.slane %v450, 5
      %v453 = vsel %vm355, %v448, %v452
      %v455 = vshrl.u32 %v347, 16
      %v457 = vrot.slane %v455, 4
      %v458 = vshll.u32 %v347, 16
      %v460 = vrot.slane %v458, 5
      %v461 = vor.u32 %v457, %v460
      %v462 = vrot.slane %v461, 4
      %v464 = vshll.u32 %v348, 16
      %v466 = vrot.slane %v464, 5
      %v467 = vsel %vm355, %v462, %v466
      %v468 = vld [vmem:[%s2] sm:$0xf]
      %s469 = scalar_lea.vmem %s2, 4
      %v470 = vld [vmem:[%s469] sm:$0xf]
      %v471 = vunpack.c.l.b16 %v369
      %v472 = vunpack.c.l.b16 %v383
      %v473 = vunpack.c.l.b16 %v397
      %v474 = vunpack.c.l.b16 %v411
      %v475 = vunpack.c.l.b16 %v425
      %v476 = vunpack.c.l.b16 %v439
      %v477 = vunpack.c.l.b16 %v453
      %v478 = vunpack.c.l.b16 %v467
      %v479 = vpack.c.b16 %v472, %v471
      %v480 = vpack.c.b16 %v474, %v473
      %v481 = vpack.c.b16 %v476, %v475
      %v482 = vpack.c.b16 %v478, %v477
      %vm483 = vcmask 64512
      %v485 = vsel %vm483, %v479, 0
      %v488 = vsel %vm483, %v480, 0
      %v491 = vsel %vm483, %v481, 0
      %v494 = vsel %vm483, %v482, 0
      %vm496 = vcmask 1043456
      %v498 = vsel %vm496, %v470, 0
      %500 = vmatprep.subr.bf16.mxu0 0
      %501 = vmatpush1.bf16.msra.mxu0 %v498
      %502 = vmatprep.subr.bf16.mxu0 0
      %503 = vmatpush1.bf16.msra.mxu0 0
      %504 = vmatprep.subr.bf16.mxu0 0
      %505 = vmatpush1.bf16.msra.mxu0 0
      %506 = vmatprep.subr.bf16.mxu0 0
      %507 = vmatpush1.bf16.msra.mxu0 0
      %508 = vmatprep.subr.bf16.mxu0 0
      %509 = vmatpush1.bf16.msra.mxu0 0
      %510 = vmatprep.subr.bf16.mxu0 0
      %511 = vmatpush1.bf16.msra.mxu0 0
      %512 = vmatprep.subr.bf16.mxu0 0
      %513 = vmatpush1.bf16.msra.mxu0 0
      %514 = vmatprep.subr.bf16.mxu0 0
      %515 = vmatpush1.bf16.msra.mxu0 0
      %516 = vmatprep.subr.bf16.mxu0 0
      %517 = vmatpush1.bf16.msra.mxu0 0
      %518 = vmatprep.subr.bf16.mxu0 0
      %519 = vmatpush1.bf16.msra.mxu0 0
      %520 = vmatprep.subr.bf16.mxu0 0
      %521 = vmatpush1.bf16.msra.mxu0 0
      %522 = vmatprep.subr.bf16.mxu0 0
      %523 = vmatpush1.bf16.msra.mxu0 0
      %524 = vmatprep.subr.bf16.mxu0 0
      %525 = vmatpush1.bf16.msra.mxu0 0
      %526 = vmatprep.subr.bf16.mxu0 0
      %527 = vmatpush1.bf16.msra.mxu0 0
      %528 = vmatprep.subr.bf16.mxu0 0
      %529 = vmatpush1.bf16.msra.mxu0 0
      %530 = vmatprep.subr.bf16.mxu0 0
      %531 = vmatpush1.bf16.msra.mxu0 0
      %532 = vmatprep.mubr.bf16.mxu0 0
      %533 = vmatmul.mubr.bf16.gmra.mrb[0].mxu0 %v485
      %v534 = vpop.f32.mrb[0].mxu0
      %v535 = vadd.f32 0.0, %v534
      %v536 = vpop.f32.mrb[0].mxu0
      %v537 = vpop.f32.mrb[0].mxu0
      %v538 = vadd.f32 0.0, %v537
      %v539 = vpop.f32.mrb[0].mxu0
      %540 = vmatprep.mubr.bf16.mxu0 0
      %541 = vmatmul.mubr.bf16.gmra.mrb[0].mxu0 %v488
      %v542 = vpop.f32.mrb[0].mxu0
      %v543 = vadd.f32 0.0, %v542
      %v544 = vpop.f32.mrb[0].mxu0
      %v545 = vpop.f32.mrb[0].mxu0
      %v546 = vadd.f32 0.0, %v545
      %v547 = vpop.f32.mrb[0].mxu0
      %548 = vmatprep.mubr.bf16.mxu0 0
      %549 = vmatmul.mubr.bf16.gmra.mrb[0].mxu0 %v491
      %v550 = vpop.f32.mrb[0].mxu0
      %v551 = vadd.f32 0.0, %v550
      %v552 = vpop.f32.mrb[0].mxu0
      %v553 = vpop.f32.mrb[0].mxu0
      %v554 = vadd.f32 0.0, %v553
      %v555 = vpop.f32.mrb[0].mxu0
      %556 = vmatprep.mubr.bf16.mxu0 0
      %557 = vmatmul.mubr.bf16.gmra.mrb[0].mxu0 %v494
      %v558 = vpop.f32.mrb[0].mxu0
      %v559 = vadd.f32 0.0, %v558
      %v560 = vpop.f32.mrb[0].mxu0
      %v561 = vpop.f32.mrb[0].mxu0
      %v562 = vadd.f32 0.0, %v561
      %v563 = vpop.f32.mrb[0].mxu0
      %564 = vdwg.mxu0
      %v573 = vunpack.c.l.b16 %v319
      %v574 = vunpack.c.l.b16 %v323
      %v575 = vunpack.c.l.b16 %v327
      %v576 = vunpack.c.l.b16 %v331
      %v577 = vunpack.c.l.b16 %v335
      %v578 = vunpack.c.l.b16 %v339
      %v579 = vunpack.c.l.b16 %v343
      %v580 = vunpack.c.l.b16 %v347
      %v581 = vpack.c.b16 %v574, %v573
      %v582 = vpack.c.b16 %v576, %v575
      %v583 = vpack.c.b16 %v578, %v577
      %v584 = vpack.c.b16 %v580, %v579
      %v586 = vsel %vm483, %v581, 0
      %v589 = vsel %vm483, %v582, 0
      %v592 = vsel %vm483, %v583, 0
      %v595 = vsel %vm483, %v584, 0
      %v598 = vsel %vm496, %v468, 0
      %600 = vmatprep.subr.bf16.mxu0 0
      %601 = vmatpush1.bf16.msra.mxu0 %v598
      %602 = vmatprep.subr.bf16.mxu0 0
      %603 = vmatpush1.bf16.msra.mxu0 0
      %604 = vmatprep.subr.bf16.mxu0 0
      %605 = vmatpush1.bf16.msra.mxu0 0
      %606 = vmatprep.subr.bf16.mxu0 0
      %607 = vmatpush1.bf16.msra.mxu0 0
      %608 = vmatprep.subr.bf16.mxu0 0
      %609 = vmatpush1.bf16.msra.mxu0 0
      %610 = vmatprep.subr.bf16.mxu0 0
      %611 = vmatpush1.bf16.msra.mxu0 0
      %612 = vmatprep.subr.bf16.mxu0 0
      %613 = vmatpush1.bf16.msra.mxu0 0
      %614 = vmatprep.subr.bf16.mxu0 0
      %615 = vmatpush1.bf16.msra.mxu0 0
      %616 = vmatprep.subr.bf16.mxu0 0
      %617 = vmatpush1.bf16.msra.mxu0 0
      %618 = vmatprep.subr.bf16.mxu0 0
      %619 = vmatpush1.bf16.msra.mxu0 0
      %620 = vmatprep.subr.bf16.mxu0 0
      %621 = vmatpush1.bf16.msra.mxu0 0
      %622 = vmatprep.subr.bf16.mxu0 0
      %623 = vmatpush1.bf16.msra.mxu0 0
      %624 = vmatprep.subr.bf16.mxu0 0
      %625 = vmatpush1.bf16.msra.mxu0 0
      %626 = vmatprep.subr.bf16.mxu0 0
      %627 = vmatpush1.bf16.msra.mxu0 0
      %628 = vmatprep.subr.bf16.mxu0 0
      %629 = vmatpush1.bf16.msra.mxu0 0
      %630 = vmatprep.subr.bf16.mxu0 0
      %631 = vmatpush1.bf16.msra.mxu0 0
      %632 = vmatprep.mubr.bf16.mxu0 0
      %633 = vmatmul.mubr.bf16.gmra.mrb[0].mxu0 %v586
      %v634 = vpop.f32.mrb[0].mxu0
      %v635 = vadd.f32 %v535, %v634
      %v636 = vpop.f32.mrb[0].mxu0
      %v637 = vpop.f32.mrb[0].mxu0
      %v638 = vadd.f32 %v538, %v637
      %v639 = vpop.f32.mrb[0].mxu0
      %640 = vmatprep.mubr.bf16.mxu0 0
      %641 = vmatmul.mubr.bf16.gmra.mrb[0].mxu0 %v589
      %v642 = vpop.f32.mrb[0].mxu0
      %v643 = vadd.f32 %v543, %v642
      %v644 = vpop.f32.mrb[0].mxu0
      %v645 = vpop.f32.mrb[0].mxu0
      %v646 = vadd.f32 %v546, %v645
      %v647 = vpop.f32.mrb[0].mxu0
      %648 = vmatprep.mubr.bf16.mxu0 0
      %649 = vmatmul.mubr.bf16.gmra.mrb[0].mxu0 %v592
      %v650 = vpop.f32.mrb[0].mxu0
      %v651 = vadd.f32 %v551, %v650
      %v652 = vpop.f32.mrb[0].mxu0
      %v653 = vpop.f32.mrb[0].mxu0
      %v654 = vadd.f32 %v554, %v653
      %v655 = vpop.f32.mrb[0].mxu0
      %656 = vmatprep.mubr.bf16.mxu0 0
      %657 = vmatmul.mubr.bf16.gmra.mrb[0].mxu0 %v595
      %v658 = vpop.f32.mrb[0].mxu0
      %v659 = vadd.f32 %v559, %v658
      %v660 = vpop.f32.mrb[0].mxu0
      %v661 = vpop.f32.mrb[0].mxu0
      %v662 = vadd.f32 %v562, %v661
      %v663 = vpop.f32.mrb[0].mxu0
      %664 = vdwg.mxu0
      %v666 = vshrl.u32 %v321, 16
      %v668 = vrot.slane %v666, 4
      %v669 = vshll.u32 %v321, 16
      %v671 = vrot.slane %v669, 5
      %v672 = vor.u32 %v668, %v671
      %v673 = vrot.slane %v672, 4
      %v675 = vshll.u32 %v322, 16
      %v677 = vrot.slane %v675, 5
      %v678 = vsel %vm355, %v673, %v677
      %v680 = vshrl.u32 %v325, 16
      %v682 = vrot.slane %v680, 4
      %v683 = vshll.u32 %v325, 16
      %v685 = vrot.slane %v683, 5
      %v686 = vor.u32 %v682, %v685
      %v687 = vrot.slane %v686, 4
      %v689 = vshll.u32 %v326, 16
      %v691 = vrot.slane %v689, 5
      %v692 = vsel %vm355, %v687, %v691
      %v694 = vshrl.u32 %v329, 16
      %v696 = vrot.slane %v694, 4
      %v697 = vshll.u32 %v329, 16
      %v699 = vrot.slane %v697, 5
      %v700 = vor.u32 %v696, %v699
      %v701 = vrot.slane %v700, 4
      %v703 = vshll.u32 %v330, 16
      %v705 = vrot.slane %v703, 5
      %v706 = vsel %vm355, %v701, %v705
      %v708 = vshrl.u32 %v333, 16
      %v710 = vrot.slane %v708, 4
      %v711 = vshll.u32 %v333, 16
      %v713 = vrot.slane %v711, 5
      %v714 = vor.u32 %v710, %v713
      %v715 = vrot.slane %v714, 4
      %v717 = vshll.u32 %v334, 16
      %v719 = vrot.slane %v717, 5
      %v720 = vsel %vm355, %v715, %v719
      %v722 = vshrl.u32 %v337, 16
      %v724 = vrot.slane %v722, 4
      %v725 = vshll.u32 %v337, 16
      %v727 = vrot.slane %v725, 5
      %v728 = vor.u32 %v724, %v727
      %v729 = vrot.slane %v728, 4
      %v731 = vshll.u32 %v338, 16
      %v733 = vrot.slane %v731, 5
      %v734 = vsel %vm355, %v729, %v733
      %v736 = vshrl.u32 %v341, 16
      %v738 = vrot.slane %v736, 4
      %v739 = vshll.u32 %v341, 16
      %v741 = vrot.slane %v739, 5
      %v742 = vor.u32 %v738, %v741
      %v743 = vrot.slane %v742, 4
      %v745 = vshll.u32 %v342, 16
      %v747 = vrot.slane %v745, 5
      %v748 = vsel %vm355, %v743, %v747
      %v750 = vshrl.u32 %v345, 16
      %v752 = vrot.slane %v750, 4
      %v753 = vshll.u32 %v345, 16
      %v755 = vrot.slane %v753, 5
      %v756 = vor.u32 %v752, %v755
      %v757 = vrot.slane %v756, 4
      %v759 = vshll.u32 %v346, 16
      %v761 = vrot.slane %v759, 5
      %v762 = vsel %vm355, %v757, %v761
      %v764 = vshrl.u32 %v349, 16
      %v766 = vrot.slane %v764, 4
      %v767 = vshll.u32 %v349, 16
      %v769 = vrot.slane %v767, 5
      %v770 = vor.u32 %v766, %v769
      %v771 = vrot.slane %v770, 4
      %v773 = vshll.u32 %v350, 16
      %v775 = vrot.slane %v773, 5
      %v776 = vsel %vm355, %v771, %v775
      %s777 = scalar_lea.vmem %s2, 8
      %v778 = vld [vmem:[%s777] sm:$0xf]
      %v787 = vunpack.c.l.b16 %v321
      %v788 = vunpack.c.l.b16 %v325
      %v789 = vunpack.c.l.b16 %v329
      %v790 = vunpack.c.l.b16 %v333
      %v791 = vunpack.c.l.b16 %v337
      %v792 = vunpack.c.l.b16 %v341
      %v793 = vunpack.c.l.b16 %v345
      %v794 = vunpack.c.l.b16 %v349
      %v795 = vpack.c.b16 %v788, %v787
      %v796 = vpack.c.b16 %v790, %v789
      %v797 = vpack.c.b16 %v792, %v791
      %v798 = vpack.c.b16 %v794, %v793
      %v800 = vsel %vm483, %v795, 0
      %v803 = vsel %vm483, %v796, 0
      %v806 = vsel %vm483, %v797, 0
      %v809 = vsel %vm483, %v798, 0
      %v812 = vsel %vm496, %v778, 0
      %814 = vmatprep.subr.bf16.mxu0 0
      %815 = vmatpush1.bf16.msra.mxu0 %v812
      %816 = vmatprep.subr.bf16.mxu0 0
      %817 = vmatpush1.bf16.msra.mxu0 0
      %818 = vmatprep.subr.bf16.mxu0 0
      %819 = vmatpush1.bf16.msra.mxu0 0
      %820 = vmatprep.subr.bf16.mxu0 0
      %821 = vmatpush1.bf16.msra.mxu0 0
      %822 = vmatprep.subr.bf16.mxu0 0
      %823 = vmatpush1.bf16.msra.mxu0 0
      %824 = vmatprep.subr.bf16.mxu0 0
      %825 = vmatpush1.bf16.msra.mxu0 0
      %826 = vmatprep.subr.bf16.mxu0 0
      %827 = vmatpush1.bf16.msra.mxu0 0
      %828 = vmatprep.subr.bf16.mxu0 0
      %829 = vmatpush1.bf16.msra.mxu0 0
      %830 = vmatprep.subr.bf16.mxu0 0
      %831 = vmatpush1.bf16.msra.mxu0 0
      %832 = vmatprep.subr.bf16.mxu0 0
      %833 = vmatpush1.bf16.msra.mxu0 0
      %834 = vmatprep.subr.bf16.mxu0 0
      %835 = vmatpush1.bf16.msra.mxu0 0
      %836 = vmatprep.subr.bf16.mxu0 0
      %837 = vmatpush1.bf16.msra.mxu0 0
      %838 = vmatprep.subr.bf16.mxu0 0
      %839 = vmatpush1.bf16.msra.mxu0 0
      %840 = vmatprep.subr.bf16.mxu0 0
      %841 = vmatpush1.bf16.msra.mxu0 0
      %842 = vmatprep.subr.bf16.mxu0 0
      %843 = vmatpush1.bf16.msra.mxu0 0
      %844 = vmatprep.subr.bf16.mxu0 0
      %845 = vmatpush1.bf16.msra.mxu0 0
      %846 = vmatprep.mubr.bf16.mxu0 0
      %847 = vmatmul.mubr.bf16.gmra.mrb[0].mxu0 %v800
      %v848 = vpop.f32.mrb[0].mxu0
      %v849 = vadd.f32 0.0, %v848
      %v850 = vpop.f32.mrb[0].mxu0
      %v851 = vpop.f32.mrb[0].mxu0
      %v852 = vadd.f32 0.0, %v851
      %v853 = vpop.f32.mrb[0].mxu0
      %854 = vmatprep.mubr.bf16.mxu0 0
      %855 = vmatmul.mubr.bf16.gmra.mrb[0].mxu0 %v803
      %v856 = vpop.f32.mrb[0].mxu0
      %v857 = vadd.f32 0.0, %v856
      %v858 = vpop.f32.mrb[0].mxu0
      %v859 = vpop.f32.mrb[0].mxu0
      %v860 = vadd.f32 0.0, %v859
      %v861 = vpop.f32.mrb[0].mxu0
      %862 = vmatprep.mubr.bf16.mxu0 0
      %863 = vmatmul.mubr.bf16.gmra.mrb[0].mxu0 %v806
      %v864 = vpop.f32.mrb[0].mxu0
      %v865 = vadd.f32 0.0, %v864
      %v866 = vpop.f32.mrb[0].mxu0
      %v867 = vpop.f32.mrb[0].mxu0
      %v868 = vadd.f32 0.0, %v867
      %v869 = vpop.f32.mrb[0].mxu0
      %870 = vmatprep.mubr.bf16.mxu0 0
      %871 = vmatmul.mubr.bf16.gmra.mrb[0].mxu0 %v809
      %v872 = vpop.f32.mrb[0].mxu0
      %v873 = vadd.f32 0.0, %v872
      %v874 = vpop.f32.mrb[0].mxu0
      %v875 = vpop.f32.mrb[0].mxu0
      %v876 = vadd.f32 0.0, %v875
      %v877 = vpop.f32.mrb[0].mxu0
      %878 = vdwg.mxu0
      %v879 = vadd.f32 %v635, %v849
      %v880 = vadd.f32 %v638, %v852
      %v881 = vadd.f32 %v643, %v857
      %v882 = vadd.f32 %v646, %v860
      %v883 = vadd.f32 %v651, %v865
      %v884 = vadd.f32 %v654, %v868
      %v885 = vadd.f32 %v659, %v873
      %v886 = vadd.f32 %v662, %v876
      %s887 = scalar_lea.vmem %s2, 12
      %v888 = vld [vmem:[%s887] sm:$0xf]
      %v889 = vunpack.c.l.b16 %v678
      %v890 = vunpack.c.l.b16 %v692
      %v891 = vunpack.c.l.b16 %v706
      %v892 = vunpack.c.l.b16 %v720
      %v893 = vunpack.c.l.b16 %v734
      %v894 = vunpack.c.l.b16 %v748
      %v895 = vunpack.c.l.b16 %v762
      %v896 = vunpack.c.l.b16 %v776
      %v897 = vpack.c.b16 %v890, %v889
      %v898 = vpack.c.b16 %v892, %v891
      %v899 = vpack.c.b16 %v894, %v893
      %v900 = vpack.c.b16 %v896, %v895
      %v902 = vsel %vm483, %v897, 0
      %v905 = vsel %vm483, %v898, 0
      %v908 = vsel %vm483, %v899, 0
      %v911 = vsel %vm483, %v900, 0
      %v914 = vsel %vm496, %v888, 0
      %916 = vmatprep.subr.bf16.mxu0 0
      %917 = vmatpush1.bf16.msra.mxu0 %v914
      %918 = vmatprep.subr.bf16.mxu0 0
      %919 = vmatpush1.bf16.msra.mxu0 0
      %920 = vmatprep.subr.bf16.mxu0 0
      %921 = vmatpush1.bf16.msra.mxu0 0
      %922 = vmatprep.subr.bf16.mxu0 0
      %923 = vmatpush1.bf16.msra.mxu0 0
      %924 = vmatprep.subr.bf16.mxu0 0
      %925 = vmatpush1.bf16.msra.mxu0 0
      %926 = vmatprep.subr.bf16.mxu0 0
      %927 = vmatpush1.bf16.msra.mxu0 0
      %928 = vmatprep.subr.bf16.mxu0 0
      %929 = vmatpush1.bf16.msra.mxu0 0
      %930 = vmatprep.subr.bf16.mxu0 0
      %931 = vmatpush1.bf16.msra.mxu0 0
      %932 = vmatprep.subr.bf16.mxu0 0
      %933 = vmatpush1.bf16.msra.mxu0 0
      %934 = vmatprep.subr.bf16.mxu0 0
      %935 = vmatpush1.bf16.msra.mxu0 0
      %936 = vmatprep.subr.bf16.mxu0 0
      %937 = vmatpush1.bf16.msra.mxu0 0
      %938 = vmatprep.subr.bf16.mxu0 0
      %939 = vmatpush1.bf16.msra.mxu0 0
      %940 = vmatprep.subr.bf16.mxu0 0
      %941 = vmatpush1.bf16.msra.mxu0 0
      %942 = vmatprep.subr.bf16.mxu0 0
      %943 = vmatpush1.bf16.msra.mxu0 0
      %944 = vmatprep.subr.bf16.mxu0 0
      %945 = vmatpush1.bf16.msra.mxu0 0
      %946 = vmatprep.subr.bf16.mxu0 0
      %947 = vmatpush1.bf16.msra.mxu0 0
      %948 = vmatprep.mubr.bf16.mxu0 0
      %949 = vmatmul.mubr.bf16.gmra.mrb[0].mxu0 %v902
      %v950 = vpop.f32.mrb[0].mxu0
      %v951 = vadd.f32 0.0, %v950
      %v952 = vpop.f32.mrb[0].mxu0
      %v953 = vpop.f32.mrb[0].mxu0
      %v954 = vadd.f32 0.0, %v953
      %v955 = vpop.f32.mrb[0].mxu0
      %956 = vmatprep.mubr.bf16.mxu0 0
      %957 = vmatmul.mubr.bf16.gmra.mrb[0].mxu0 %v905
      %v958 = vpop.f32.mrb[0].mxu0
      %v959 = vadd.f32 0.0, %v958
      %v960 = vpop.f32.mrb[0].mxu0
      %v961 = vpop.f32.mrb[0].mxu0
      %v962 = vadd.f32 0.0, %v961
      %v963 = vpop.f32.mrb[0].mxu0
      %964 = vmatprep.mubr.bf16.mxu0 0
      %965 = vmatmul.mubr.bf16.gmra.mrb[0].mxu0 %v908
      %v966 = vpop.f32.mrb[0].mxu0
      %v967 = vadd.f32 0.0, %v966
      %v968 = vpop.f32.mrb[0].mxu0
      %v969 = vpop.f32.mrb[0].mxu0
      %v970 = vadd.f32 0.0, %v969
      %v971 = vpop.f32.mrb[0].mxu0
      %972 = vmatprep.mubr.bf16.mxu0 0
      %973 = vmatmul.mubr.bf16.gmra.mrb[0].mxu0 %v911
      %v974 = vpop.f32.mrb[0].mxu0
      %v975 = vadd.f32 0.0, %v974
      %v976 = vpop.f32.mrb[0].mxu0
      %v977 = vpop.f32.mrb[0].mxu0
      %v978 = vadd.f32 0.0, %v977
      %v979 = vpop.f32.mrb[0].mxu0
      %980 = vdwg.mxu0
      %v981 = vadd.f32 %v879, %v951
      %v982 = vadd.f32 %v880, %v954
      %v983 = vadd.f32 %v881, %v959
      %v984 = vadd.f32 %v882, %v962
      %v985 = vadd.f32 %v883, %v967
      %v986 = vadd.f32 %v884, %v970
      %v987 = vadd.f32 %v885, %v975
      %v988 = vadd.f32 %v886, %v978
      %v990 = vshrl.u32 %v351, 16
      %v992 = vrot.slane %v990, 4
      %v993 = vshll.u32 %v351, 16
      %v995 = vrot.slane %v993, 5
      %v996 = vor.u32 %v992, %v995
      %v997 = vrot.slane %v996, 4
      %v999 = vshll.u32 %v352, 16
      %v1001 = vrot.slane %v999, 5
      %v1002 = vsel %vm355, %v997, %v1001
      %s1003 = scalar_lea.vmem %s2, 16
      %v1004 = vld [vmem:[%s1003] sm:$0xf]
      %v1006 = vunpack.c.l.b16 %v351
      %v1007 = vpack.c.b16 %v575, %v574
      %v1008 = vpack.c.b16 %v577, %v576
      %v1009 = vpack.c.b16 %v579, %v578
      %v1010 = vpack.c.b16 %v1006, %v580
      %v1012 = vsel %vm483, %v1007, 0
      %v1015 = vsel %vm483, %v1008, 0
      %v1018 = vsel %vm483, %v1009, 0
      %v1021 = vsel %vm483, %v1010, 0
      %v1024 = vsel %vm496, %v1004, 0
      %1026 = vmatprep.subr.bf16.mxu0 0
      %1027 = vmatpush1.bf16.msra.mxu0 %v1024
      %1028 = vmatprep.subr.bf16.mxu0 0
      %1029 = vmatpush1.bf16.msra.mxu0 0
      %1030 = vmatprep.subr.bf16.mxu0 0
      %1031 = vmatpush1.bf16.msra.mxu0 0
      %1032 = vmatprep.subr.bf16.mxu0 0
      %1033 = vmatpush1.bf16.msra.mxu0 0
      %1034 = vmatprep.subr.bf16.mxu0 0
      %1035 = vmatpush1.bf16.msra.mxu0 0
      %1036 = vmatprep.subr.bf16.mxu0 0
      %1037 = vmatpush1.bf16.msra.mxu0 0
      %1038 = vmatprep.subr.bf16.mxu0 0
      %1039 = vmatpush1.bf16.msra.mxu0 0
      %1040 = vmatprep.subr.bf16.mxu0 0
      %1041 = vmatpush1.bf16.msra.mxu0 0
      %1042 = vmatprep.subr.bf16.mxu0 0
      %1043 = vmatpush1.bf16.msra.mxu0 0
      %1044 = vmatprep.subr.bf16.mxu0 0
      %1045 = vmatpush1.bf16.msra.mxu0 0
      %1046 = vmatprep.subr.bf16.mxu0 0
      %1047 = vmatpush1.bf16.msra.mxu0 0
      %1048 = vmatprep.subr.bf16.mxu0 0
      %1049 = vmatpush1.bf16.msra.mxu0 0
      %1050 = vmatprep.subr.bf16.mxu0 0
      %1051 = vmatpush1.bf16.msra.mxu0 0
      %1052 = vmatprep.subr.bf16.mxu0 0
      %1053 = vmatpush1.bf16.msra.mxu0 0
      %1054 = vmatprep.subr.bf16.mxu0 0
      %1055 = vmatpush1.bf16.msra.mxu0 0
      %1056 = vmatprep.subr.bf16.mxu0 0
      %1057 = vmatpush1.bf16.msra.mxu0 0
      %1058 = vmatprep.mubr.bf16.mxu0 0
      %1059 = vmatmul.mubr.bf16.gmra.mrb[0].mxu0 %v1012
      %v1060 = vpop.f32.mrb[0].mxu0
      %v1061 = vadd.f32 0.0, %v1060
      %v1062 = vpop.f32.mrb[0].mxu0
      %v1063 = vpop.f32.mrb[0].mxu0
      %v1064 = vadd.f32 0.0, %v1063
      %v1065 = vpop.f32.mrb[0].mxu0
      %1066 = vmatprep.mubr.bf16.mxu0 0
      %1067 = vmatmul.mubr.bf16.gmra.mrb[0].mxu0 %v1015
      %v1068 = vpop.f32.mrb[0].mxu0
      %v1069 = vadd.f32 0.0, %v1068
      %v1070 = vpop.f32.mrb[0].mxu0
      %v1071 = vpop.f32.mrb[0].mxu0
      %v1072 = vadd.f32 0.0, %v1071
      %v1073 = vpop.f32.mrb[0].mxu0
      %1074 = vmatprep.mubr.bf16.mxu0 0
      %1075 = vmatmul.mubr.bf16.gmra.mrb[0].mxu0 %v1018
      %v1076 = vpop.f32.mrb[0].mxu0
      %v1077 = vadd.f32 0.0, %v1076
      %v1078 = vpop.f32.mrb[0].mxu0
      %v1079 = vpop.f32.mrb[0].mxu0
      %v1080 = vadd.f32 0.0, %v1079
      %v1081 = vpop.f32.mrb[0].mxu0
      %1082 = vmatprep.mubr.bf16.mxu0 0
      %1083 = vmatmul.mubr.bf16.gmra.mrb[0].mxu0 %v1021
      %v1084 = vpop.f32.mrb[0].mxu0
      %v1085 = vadd.f32 0.0, %v1084
      %v1086 = vpop.f32.mrb[0].mxu0
      %v1087 = vpop.f32.mrb[0].mxu0
      %v1088 = vadd.f32 0.0, %v1087
      %v1089 = vpop.f32.mrb[0].mxu0
      %1090 = vdwg.mxu0
      %v1091 = vadd.f32 %v981, %v1061
      %v1092 = vadd.f32 %v982, %v1064
      %v1093 = vadd.f32 %v983, %v1069
      %v1094 = vadd.f32 %v984, %v1072
      %v1095 = vadd.f32 %v985, %v1077
      %v1096 = vadd.f32 %v986, %v1080
      %v1097 = vadd.f32 %v987, %v1085
      %v1098 = vadd.f32 %v988, %v1088
      %s1099 = scalar_lea.vmem %s2, 20
      %v1100 = vld [vmem:[%s1099] sm:$0xf]
      %v1101 = vunpack.c.l.b16 %v1002
      %v1102 = vpack.c.b16 %v473, %v472
      %v1103 = vpack.c.b16 %v475, %v474
      %v1104 = vpack.c.b16 %v477, %v476
      %v1105 = vpack.c.b16 %v1101, %v478
      %v1107 = vsel %vm483, %v1102, 0
      %v1110 = vsel %vm483, %v1103, 0
      %v1113 = vsel %vm483, %v1104, 0
      %v1116 = vsel %vm483, %v1105, 0
      %v1119 = vsel %vm496, %v1100, 0
      %1121 = vmatprep.subr.bf16.mxu0 0
      %1122 = vmatpush1.bf16.msra.mxu0 %v1119
      %1123 = vmatprep.subr.bf16.mxu0 0
      %1124 = vmatpush1.bf16.msra.mxu0 0
      %1125 = vmatprep.subr.bf16.mxu0 0
      %1126 = vmatpush1.bf16.msra.mxu0 0
      %1127 = vmatprep.subr.bf16.mxu0 0
      %1128 = vmatpush1.bf16.msra.mxu0 0
      %1129 = vmatprep.subr.bf16.mxu0 0
      %1130 = vmatpush1.bf16.msra.mxu0 0
      %1131 = vmatprep.subr.bf16.mxu0 0
      %1132 = vmatpush1.bf16.msra.mxu0 0
      %1133 = vmatprep.subr.bf16.mxu0 0
      %1134 = vmatpush1.bf16.msra.mxu0 0
      %1135 = vmatprep.subr.bf16.mxu0 0
      %1136 = vmatpush1.bf16.msra.mxu0 0
      %1137 = vmatprep.subr.bf16.mxu0 0
      %1138 = vmatpush1.bf16.msra.mxu0 0
      %1139 = vmatprep.subr.bf16.mxu0 0
      %1140 = vmatpush1.bf16.msra.mxu0 0
      %1141 = vmatprep.subr.bf16.mxu0 0
      %1142 = vmatpush1.bf16.msra.mxu0 0
      %1143 = vmatprep.subr.bf16.mxu0 0
      %1144 = vmatpush1.bf16.msra.mxu0 0
      %1145 = vmatprep.subr.bf16.mxu0 0
      %1146 = vmatpush1.bf16.msra.mxu0 0
      %1147 = vmatprep.subr.bf16.mxu0 0
      %1148 = vmatpush1.bf16.msra.mxu0 0
      %1149 = vmatprep.subr.bf16.mxu0 0
      %1150 = vmatpush1.bf16.msra.mxu0 0
      %1151 = vmatprep.subr.bf16.mxu0 0
      %1152 = vmatpush1.bf16.msra.mxu0 0
      %1153 = vmatprep.mubr.bf16.mxu0 0
      %1154 = vmatmul.mubr.bf16.gmra.mrb[0].mxu0 %v1107
      %v1155 = vpop.f32.mrb[0].mxu0
      %v1156 = vadd.f32 0.0, %v1155
      %v1157 = vpop.f32.mrb[0].mxu0
      %v1158 = vpop.f32.mrb[0].mxu0
      %v1159 = vadd.f32 0.0, %v1158
      %v1160 = vpop.f32.mrb[0].mxu0
      %1161 = vmatprep.mubr.bf16.mxu0 0
      %1162 = vmatmul.mubr.bf16.gmra.mrb[0].mxu0 %v1110
      %v1163 = vpop.f32.mrb[0].mxu0
      %v1164 = vadd.f32 0.0, %v1163
      %v1165 = vpop.f32.mrb[0].mxu0
      %v1166 = vpop.f32.mrb[0].mxu0
      %v1167 = vadd.f32 0.0, %v1166
      %v1168 = vpop.f32.mrb[0].mxu0
      %1169 = vmatprep.mubr.bf16.mxu0 0
      %1170 = vmatmul.mubr.bf16.gmra.mrb[0].mxu0 %v1113
      %v1171 = vpop.f32.mrb[0].mxu0
      %v1172 = vadd.f32 0.0, %v1171
      %v1173 = vpop.f32.mrb[0].mxu0
      %v1174 = vpop.f32.mrb[0].mxu0
      %v1175 = vadd.f32 0.0, %v1174
      %v1176 = vpop.f32.mrb[0].mxu0
      %1177 = vmatprep.mubr.bf16.mxu0 0
      %1178 = vmatmul.mubr.bf16.gmra.mrb[0].mxu0 %v1116
      %v1179 = vpop.f32.mrb[0].mxu0
      %v1180 = vadd.f32 0.0, %v1179
      %v1181 = vpop.f32.mrb[0].mxu0
      %v1182 = vpop.f32.mrb[0].mxu0
      %v1183 = vadd.f32 0.0, %v1182
      %v1184 = vpop.f32.mrb[0].mxu0
      %1185 = vdwg.mxu0
      %v1186 = vadd.f32 %v1091, %v1156
      %v1187 = vadd.f32 %v1092, %v1159
      %v1188 = vadd.f32 %v1093, %v1164
      %v1189 = vadd.f32 %v1094, %v1167
      %v1190 = vadd.f32 %v1095, %v1172
      %v1191 = vadd.f32 %v1096, %v1175
      %v1192 = vadd.f32 %v1097, %v1180
      %v1193 = vadd.f32 %v1098, %v1183
      %v1194 = vld [vmem:[%s3] sm:$0x1]
      %v1196 = vlaneseq
      %v1197 = vshrl.u32 %v1196, 7
      %v1198 = vsub.s32 0, %v1197
      %v1199 = vrot.slane %v1194, %v1198
      %v1201 = vadd.f32 %v1186, %v1199
      %v1202 = vadd.f32 %v1187, %v1199
      %v1203 = vadd.f32 %v1188, %v1199
      %v1204 = vadd.f32 %v1189, %v1199
      %v1205 = vadd.f32 %v1190, %v1199
      %v1206 = vadd.f32 %v1191, %v1199
      %v1207 = vadd.f32 %v1192, %v1199
      %v1208 = vadd.f32 %v1193, %v1199
      %1209 = vst [vmem:[%s316] sm:$0xff] %v1201
      %1210 = vst [vmem:[%s316 + $0x8] sm:$0xff] %v1202
      %1211 = vst [vmem:[%s316 + $0x10] sm:$0xff] %v1203
      %1212 = vst [vmem:[%s316 + $0x18] sm:$0xff] %v1204
      %1213 = vst [vmem:[%s316 + $0x20] sm:$0xff] %v1205
      %1214 = vst [vmem:[%s316 + $0x28] sm:$0xff] %v1206
      %1215 = vst [vmem:[%s316 + $0x30] sm:$0xff] %v1207
      %1216 = vst [vmem:[%s316 + $0x38] sm:$0xff] %v1208
      %s1217 = smul.u32 8, %s20
      %p1218 = scmp.lt.s32.totalorder %s19, 1
      %s1219 = scalar_select %p1218, %s19, 1
      %p1220 = scmp.lt.s32.totalorder %s1217, 7
      %s1221 = scalar_select %p1220, %s1217, 7
      %s1222 = smul.addr %s1219, 8
      %s1223 = sadd.s32 %s1221, %s1222
      %s1224 = smul.addr %s1223, 8
      %s1225 = scalar_lea.vmem %s4, %s1224
      // Predicated region
      $region37: #{dw_sample.1} parent=35 // pred_check
        %p1226 = pneg %p149
      $region38: #{dw_sample.1} parent=35 // pred_check_branch
        %1228 = sbr.rel (%p1226) target = $region40
      $region39: #{dw_sample.1} parent=35 // pred_region
        %s1229 = smul.u32 8, %s20
      $region40: #{dw_sample.1} parent=35 // pred_fallthru
        _
    $region36: #{dw_sample.1} parent=5 // pred_fallthru
      _
    %p1230 = scmp.le.s32.totalorder 2, %s10
    // Predicated region
    $region41: #{dw_sample.1} parent=5 // pred_check
      %p1231 = pneg %p1230
    $region42: #{dw_sample.1} parent=5 // pred_check_branch
      %1233 = sbr.rel (%p1231) target = $region44
    $region43: #{dw_sample.1} parent=5 // pred_region
      %s1234 = ssub.s32 %s10, 2
      // Predicated region
      $region45: #{dw_sample.1} parent=43 // pred_check
        %p1235 = pneg %p155
      $region46: #{dw_sample.1} parent=43 // pred_check_branch
        %1237 = sbr.rel (%p1235) target = $region48
      $region47: #{dw_sample.1} parent=43 // pred_region
        %s1238 = smul.u32 8, %s22
        %p1239 = scmp.lt.s32.totalorder %s21, 1
        %s1240 = scalar_select %p1239, %s21, 1
        %p1241 = scmp.lt.s32.totalorder %s1238, 7
        %s1242 = scalar_select %p1241, %s1238, 7
        %s1243 = smul.addr %s1240, 8
        %s1244 = sadd.s32 %s1242, %s1243
        %s1245 = smul.addr %s1244, 8
        %s1246 = scalar_lea.vmem %s4, %s1245
      $region48: #{dw_sample.1} parent=43 // pred_fallthru
        _
    $region44: #{dw_sample.1} parent=5 // pred_fallthru
      _
  $region6: #{dw_sample.1} parent=0 // loop_footer
    %s14 = sadd.s32 1, %s10
  $region7: #{dw_sample.1} parent=0 // loop_footer_branch
    %9 = sbr.rel target = $region3
  $region8: #{dw_sample.1} parent=0 // loop_exit
    _

</llo_original>
